<compile_context>
chip_gen: v7x
topology: tpu7x:2x2x1
jax: 0.10.0
libtpu: 0.0.40
codegen_flags: <defaults>
</compile_context>

<pallas_src>
import math

import jax
import jax.numpy as jnp
import numpy as np
from jax import lax
from jax.experimental import pallas as pl
from jax.experimental.pallas import tpu as pltpu

# ---------------- configuration (small, consistent with the module) ----------
B = 2          # batch
S = 8          # sequence length
D_MODEL = 32   # d_model
N_HEADS = 4    # heads
D_K = D_MODEL // N_HEADS
NEG_INF = -1000000000.0

R = B * S                     # 16 rows (flattened batch*seq)
D3 = 3 * D_MODEL              # 96 fused QKV lanes
SCORE_W = N_HEADS * R         # 64 score lanes (per-head (16,16) blocks)
PACK_W = D_MODEL + SCORE_W    # 96 packed output lanes


def mha_kernel(x_ref, wqkv_ref, bqkv_ref, wo_ref, bo_ref, bias_ref, out_ref):
    """Single grid step: whole (B*S, ·) problem lives in VMEM."""
    scale = 1.0 / math.sqrt(D_K)

    # Fused block-diagonal QKV projection: one (16,96)x(96,96) matmul + one bias add.
    qkv = jnp.dot(x_ref[...], wqkv_ref[...],
                  preferred_element_type=jnp.float32) + bqkv_ref[...]
    q = qkv[:, 0:D_MODEL] * scale            # fold 1/sqrt(d_k) once into Q
    k = qkv[:, D_MODEL:2 * D_MODEL]
    v = qkv[:, 2 * D_MODEL:3 * D_MODEL]

    mb = bias_ref[...]                       # (16,16): user mask + cross-batch -1e9

    ps = []
    ctxs = []
    for h in range(N_HEADS):                 # static unroll over heads only
        lo = h * D_K
        qh = q[:, lo:lo + D_K]               # (16, 8)
        kh = k[:, lo:lo + D_K]
        vh = v[:, lo:lo + D_K]

        # QK^T over the full B*S row slab; no transposed copy of K.
        s = lax.dot_general(qh, kh, (((1,), (1,)), ((), ())),
                            preferred_element_type=jnp.float32)   # (16, 16)
        s = s + mb

        # numerically stabilized softmax along last axis (matches torch.softmax);
        # cross-batch / masked entries underflow to exactly 0.
        s = s - jnp.max(s, axis=-1, keepdims=True)
        e = jnp.exp(s)
        p = e * pl.reciprocal(jnp.sum(e, axis=-1, keepdims=True), approx=False)

        ps.append(p)
        ctxs.append(jnp.dot(p, vh, preferred_element_type=jnp.float32))  # (16, 8)

    # Head concat via one lane interleave, then one (16,32)x(32,32) output projection.
    ctx = jnp.concatenate(ctxs, axis=-1)     # (16, 32)
    out = jnp.dot(ctx, wo_ref[...], preferred_element_type=jnp.float32) + bo_ref[...]

    # TODO(synk): nn.Dropout(p=0.1) on attention probs is stochastic; treated as
    # eval-mode identity here (deterministic kernel).

    # Single lane-dense store for both outputs: [out | p_h0 | p_h1 | p_h2 | p_h3].
    packed = jnp.concatenate([out] + ps, axis=-1)       # (16, 96)
    out_ref[...] = packed.astype(out_ref.dtype)


def multi_headed_attention(to_query, to_key, to_value, mask, params):
    wq, bq, wk, bk, wv, bv, wo, bo = params

    # --- one-time layout prep outside the kernel (tiny tensors, cheap XLA ops) ---
    # Block-diagonal fused QKV weight in (D_in, D_out) layout so the kernel does x @ W.
    wqkv = jnp.zeros((D3, D3), jnp.float32)
    wqkv = wqkv.at[0:D_MODEL, 0:D_MODEL].set(wq.T)
    wqkv = wqkv.at[D_MODEL:2 * D_MODEL, D_MODEL:2 * D_MODEL].set(wk.T)
    wqkv = wqkv.at[2 * D_MODEL:, 2 * D_MODEL:].set(wv.T)
    bqkv = jnp.concatenate([bq, bk, bv], axis=-1)        # (1, 96)
    wo_t = wo.T

    # Concat the three inputs along lanes: (B*S, 96).
    x_cat = jnp.concatenate(
        [to_query.reshape(R, D_MODEL),
         to_key.reshape(R, D_MODEL),
         to_value.reshape(R, D_MODEL)], axis=-1)

    # Additive (B*S, B*S) score bias: user-mask bias on the diagonal batch blocks,
    # -1e9 on every cross-batch block so batch elements never attend to each other.
    mb = jnp.where(mask == 0, NEG_INF, 0.0).astype(jnp.float32)          # (B, S, S)
    same_batch = (jnp.arange(B)[:, None, None, None] ==
                  jnp.arange(B)[None, None, :, None])                    # (B,1,B,1)
    big_bias = jnp.where(same_batch, mb[:, :, None, :], NEG_INF)         # (B,S,B,S)
    big_bias = big_bias.reshape(R, R).astype(jnp.float32)

    full2 = lambda i: (0, 0)

    packed = pl.pallas_call(
        mha_kernel,
        out_shape=jax.ShapeDtypeStruct((R, PACK_W), jnp.float32),
        grid_spec=pltpu.PrefetchScalarGridSpec(
            num_scalar_prefetch=0,
            grid=(1,),   # single step: whole problem in one kernel invocation
            in_specs=[
                pl.BlockSpec((R, D3), full2),              # x_cat  (xq|xk|xv)
                pl.BlockSpec((D3, D3), full2),             # fused block-diag QKV weight
                pl.BlockSpec((1, D3), full2),              # fused QKV bias
                pl.BlockSpec((D_MODEL, D_MODEL), full2),   # Wo^T (D_in, D_out)
                pl.BlockSpec((1, D_MODEL), full2),         # bo
                pl.BlockSpec((R, R), full2),               # additive score bias
            ],
            out_specs=pl.BlockSpec((R, PACK_W), full2),    # [out | scores], lane-dense
        ),
        compiler_params=pltpu.CompilerParams(dimension_semantics=("arbitrary",)),
    )(x_cat, wqkv, bqkv, wo_t, bo, big_bias)

    out = packed[:, :D_MODEL].reshape(B, S, D_MODEL)

    # Recover (B, H, S, S) scores: take the diagonal batch blocks of each head's
    # (B*S, B*S) probability matrix (cross-batch blocks are exactly 0 / unused).
    scores_flat = packed[:, D_MODEL:]                     # (B*S, H*B*S)
    scores5 = scores_flat.reshape(B, S, N_HEADS, B, S)
    idx = jnp.arange(B)
    scores = scores5[idx, :, :, idx, :]                   # (B, S, H, S)
    scores = scores.transpose(0, 2, 1, 3)                 # (B, H, S, S)
    return out, scores


def reference(to_query, to_key, to_value, mask, params):
    """Pure-JAX reference mirroring the PyTorch forward (eval mode)."""
    wq, bq, wk, bk, wv, bv, wo, bo = params

    def lin(x, w, b):
        return x @ w.T + b[0]

    def split_heads(x):  # (B,S,D) -> (B,H,S,d_k)
        return x.reshape(B, S, N_HEADS, D_K).transpose(0, 2, 1, 3)

    q = split_heads(lin(to_query, wq, bq))
    k = split_heads(lin(to_key, wk, bk))
    v = split_heads(lin(to_value, wv, bv))

    scores = jnp.einsum("bhqd,bhkd->bhqk", q, k) / math.sqrt(D_K)
    scores = jnp.where(mask[:, None, :, :] == 0, NEG_INF, scores)
    p = jax.nn.softmax(scores, axis=-1)
    ctx = jnp.einsum("bhqk,bhkd->bhqd", p, v)
    ctx = ctx.transpose(0, 2, 1, 3).reshape(B, S, D_MODEL)
    return ctx @ wo.T + bo[0], p


def init_params(key):
    bound = 1.0 / math.sqrt(D_MODEL)
    keys = jax.random.split(key, 8)
    mk_w = lambda k: jax.random.uniform(k, (D_MODEL, D_MODEL), jnp.float32, -bound, bound)
    mk_b = lambda k: jax.random.uniform(k, (1, D_MODEL), jnp.float32, -bound, bound)
    return (mk_w(keys[0]), mk_b(keys[1]),   # Wq, bq
            mk_w(keys[2]), mk_b(keys[3]),   # Wk, bk
            mk_w(keys[4]), mk_b(keys[5]),   # Wv, bv
            mk_w(keys[6]), mk_b(keys[7]))   # Wo, bo


if __name__ == "__main__":
    key = jax.random.PRNGKey(0)
    kq, kk, kv, kp = jax.random.split(key, 4)

    to_query = jax.random.normal(kq, (B, S, D_MODEL), jnp.float32)
    to_key = jax.random.normal(kk, (B, S, D_MODEL), jnp.float32)
    to_value = jax.random.normal(kv, (B, S, D_MODEL), jnp.float32)
    # causal mask, same for every batch element (broadcasts over heads)
    mask = jnp.broadcast_to(
        jnp.tril(jnp.ones((S, S), jnp.int32))[None], (B, S, S)
    ).astype(jnp.int32)

    params = init_params(kp)

    out, scores = multi_headed_attention(to_query, to_key, to_value, mask, params)
    out = jax.block_until_ready(out)
    scores = jax.block_until_ready(scores)

    ref_out, ref_scores = reference(to_query, to_key, to_value, mask, params)
    np.testing.assert_allclose(np.asarray(out), np.asarray(ref_out), rtol=1e-4, atol=1e-4)
    np.testing.assert_allclose(np.asarray(scores), np.asarray(ref_scores), rtol=1e-4, atol=1e-4)

    print("KERNEL_OK")
</pallas_src>

<mosaic_0001>
module attributes {stable_mosaic.version = 11 : i64} {
  func.func @mha_kernel(%arg0: i32, %arg1: memref<16x96xf32, #tpu.memory_space<vmem>>, %arg2: memref<96x96xf32, #tpu.memory_space<vmem>>, %arg3: memref<1x96xf32, #tpu.memory_space<vmem>>, %arg4: memref<32x32xf32, #tpu.memory_space<vmem>>, %arg5: memref<1x32xf32, #tpu.memory_space<vmem>>, %arg6: memref<16x16xf32, #tpu.memory_space<vmem>>, %arg7: memref<16x96xf32, #tpu.memory_space<vmem>>) attributes {dimension_semantics = [#tpu.dimension_semantics<arbitrary>], iteration_bounds = array<i64: 1>, scalar_prefetch = 0 : i64, scratch_operands = 0 : i64, tpu.core_type = #tpu.core_type<tc>, window_params = [{pipeline_mode = #tpu.pipeline_mode<synchronous>, transform_indices = @transform_0, window_bounds = array<i64: 16, 96>}, {pipeline_mode = #tpu.pipeline_mode<synchronous>, transform_indices = @transform_1, window_bounds = array<i64: 96, 96>}, {pipeline_mode = #tpu.pipeline_mode<synchronous>, transform_indices = @transform_2, window_bounds = array<i64: 1, 96>}, {pipeline_mode = #tpu.pipeline_mode<synchronous>, transform_indices = @transform_3, window_bounds = array<i64: 32, 32>}, {pipeline_mode = #tpu.pipeline_mode<synchronous>, transform_indices = @transform_4, window_bounds = array<i64: 1, 32>}, {pipeline_mode = #tpu.pipeline_mode<synchronous>, transform_indices = @transform_5, window_bounds = array<i64: 16, 16>}, {pipeline_mode = #tpu.pipeline_mode<synchronous>, transform_indices = @transform_6, window_bounds = array<i64: 16, 96>}]} {
    %c0 = arith.constant 0 : index
    %c0_0 = arith.constant 0 : index
    %0 = vector.load %arg1[%c0, %c0_0] : memref<16x96xf32, #tpu.memory_space<vmem>>, vector<16x96xf32>
    %c0_1 = arith.constant 0 : index
    %c0_2 = arith.constant 0 : index
    %1 = vector.load %arg2[%c0_1, %c0_2] : memref<96x96xf32, #tpu.memory_space<vmem>>, vector<96x96xf32>
    %cst = arith.constant dense<0.000000e+00> : vector<16x96xf32>
    %2 = tpu.matmul %0, %1, %cst {dimension_numbers = #tpu.dot_dimension_numbers<[1], [0], [0], [1], [0, 0, 1, 1], [], []>} : vector<16x96xf32>, vector<96x96xf32>, vector<16x96xf32> -> vector<16x96xf32>
    %c0_3 = arith.constant 0 : index
    %c0_4 = arith.constant 0 : index
    %3 = vector.load %arg3[%c0_3, %c0_4] : memref<1x96xf32, #tpu.memory_space<vmem>>, vector<1x96xf32>
    %4 = vector.broadcast %3 : vector<1x96xf32> to vector<16x96xf32>
    %5 = arith.addf %2, %4 : vector<16x96xf32>
    %6 = vector.extract_strided_slice %5 {offsets = [0, 0], sizes = [16, 32], strides = [1, 1]} : vector<16x96xf32> to vector<16x32xf32>
    %cst_5 = arith.constant 0.353553385 : f32
    %7 = vector.broadcast %cst_5 : f32 to vector<16x32xf32>
    %8 = arith.mulf %6, %7 : vector<16x32xf32>
    %9 = vector.extract_strided_slice %5 {offsets = [0, 32], sizes = [16, 32], strides = [1, 1]} : vector<16x96xf32> to vector<16x32xf32>
    %10 = vector.extract_strided_slice %5 {offsets = [0, 64], sizes = [16, 32], strides = [1, 1]} : vector<16x96xf32> to vector<16x32xf32>
    %c0_6 = arith.constant 0 : index
    %c0_7 = arith.constant 0 : index
    %11 = vector.load %arg6[%c0_6, %c0_7] : memref<16x16xf32, #tpu.memory_space<vmem>>, vector<16x16xf32>
    %12 = vector.extract_strided_slice %8 {offsets = [0, 0], sizes = [16, 8], strides = [1, 1]} : vector<16x32xf32> to vector<16x8xf32>
    %13 = vector.extract_strided_slice %9 {offsets = [0, 0], sizes = [16, 8], strides = [1, 1]} : vector<16x32xf32> to vector<16x8xf32>
    %14 = vector.extract_strided_slice %10 {offsets = [0, 0], sizes = [16, 8], strides = [1, 1]} : vector<16x32xf32> to vector<16x8xf32>
    %cst_8 = arith.constant dense<0.000000e+00> : vector<16x16xf32>
    %15 = tpu.matmul %12, %13, %cst_8 {dimension_numbers = #tpu.dot_dimension_numbers<[1], [1], [0], [0], [0, 0, 1, 0], [], []>} : vector<16x8xf32>, vector<16x8xf32>, vector<16x16xf32> -> vector<16x16xf32>
    %16 = arith.addf %15, %11 : vector<16x16xf32>
    %cst_9 = arith.constant dense<0xFF800000> : vector<16xf32>
    %17 = vector.multi_reduction <maximumf>, %16, %cst_9 [1] : vector<16x16xf32> to vector<16xf32>
    %18 = vector.shape_cast %17 : vector<16xf32> to vector<16x1xf32>
    %19 = vector.broadcast %18 : vector<16x1xf32> to vector<16x16xf32>
    %20 = arith.subf %16, %19 : vector<16x16xf32>
    %21 = math.exp %20 : vector<16x16xf32>
    %cst_10 = arith.constant dense<0.000000e+00> : vector<16xf32>
    %22 = vector.multi_reduction <add>, %21, %cst_10 [1] : vector<16x16xf32> to vector<16xf32>
    %23 = vector.shape_cast %22 : vector<16xf32> to vector<16x1xf32>
    %24 = tpu.reciprocal %23 : vector<16x1xf32> -> vector<16x1xf32>
    %25 = vector.broadcast %24 : vector<16x1xf32> to vector<16x16xf32>
    %26 = arith.mulf %21, %25 : vector<16x16xf32>
    %cst_11 = arith.constant dense<0.000000e+00> : vector<16x8xf32>
    %27 = tpu.matmul %26, %14, %cst_11 {dimension_numbers = #tpu.dot_dimension_numbers<[1], [0], [0], [1], [0, 0, 1, 1], [], []>} : vector<16x16xf32>, vector<16x8xf32>, vector<16x8xf32> -> vector<16x8xf32>
    %28 = vector.extract_strided_slice %8 {offsets = [0, 8], sizes = [16, 8], strides = [1, 1]} : vector<16x32xf32> to vector<16x8xf32>
    %29 = vector.extract_strided_slice %9 {offsets = [0, 8], sizes = [16, 8], strides = [1, 1]} : vector<16x32xf32> to vector<16x8xf32>
    %30 = vector.extract_strided_slice %10 {offsets = [0, 8], sizes = [16, 8], strides = [1, 1]} : vector<16x32xf32> to vector<16x8xf32>
    %cst_12 = arith.constant dense<0.000000e+00> : vector<16x16xf32>
    %31 = tpu.matmul %28, %29, %cst_12 {dimension_numbers = #tpu.dot_dimension_numbers<[1], [1], [0], [0], [0, 0, 1, 0], [], []>} : vector<16x8xf32>, vector<16x8xf32>, vector<16x16xf32> -> vector<16x16xf32>
    %32 = arith.addf %31, %11 : vector<16x16xf32>
    %cst_13 = arith.constant dense<0xFF800000> : vector<16xf32>
    %33 = vector.multi_reduction <maximumf>, %32, %cst_13 [1] : vector<16x16xf32> to vector<16xf32>
    %34 = vector.shape_cast %33 : vector<16xf32> to vector<16x1xf32>
    %35 = vector.broadcast %34 : vector<16x1xf32> to vector<16x16xf32>
    %36 = arith.subf %32, %35 : vector<16x16xf32>
    %37 = math.exp %36 : vector<16x16xf32>
    %cst_14 = arith.constant dense<0.000000e+00> : vector<16xf32>
    %38 = vector.multi_reduction <add>, %37, %cst_14 [1] : vector<16x16xf32> to vector<16xf32>
    %39 = vector.shape_cast %38 : vector<16xf32> to vector<16x1xf32>
    %40 = tpu.reciprocal %39 : vector<16x1xf32> -> vector<16x1xf32>
    %41 = vector.broadcast %40 : vector<16x1xf32> to vector<16x16xf32>
    %42 = arith.mulf %37, %41 : vector<16x16xf32>
    %cst_15 = arith.constant dense<0.000000e+00> : vector<16x8xf32>
    %43 = tpu.matmul %42, %30, %cst_15 {dimension_numbers = #tpu.dot_dimension_numbers<[1], [0], [0], [1], [0, 0, 1, 1], [], []>} : vector<16x16xf32>, vector<16x8xf32>, vector<16x8xf32> -> vector<16x8xf32>
    %44 = vector.extract_strided_slice %8 {offsets = [0, 16], sizes = [16, 8], strides = [1, 1]} : vector<16x32xf32> to vector<16x8xf32>
    %45 = vector.extract_strided_slice %9 {offsets = [0, 16], sizes = [16, 8], strides = [1, 1]} : vector<16x32xf32> to vector<16x8xf32>
    %46 = vector.extract_strided_slice %10 {offsets = [0, 16], sizes = [16, 8], strides = [1, 1]} : vector<16x32xf32> to vector<16x8xf32>
    %cst_16 = arith.constant dense<0.000000e+00> : vector<16x16xf32>
    %47 = tpu.matmul %44, %45, %cst_16 {dimension_numbers = #tpu.dot_dimension_numbers<[1], [1], [0], [0], [0, 0, 1, 0], [], []>} : vector<16x8xf32>, vector<16x8xf32>, vector<16x16xf32> -> vector<16x16xf32>
    %48 = arith.addf %47, %11 : vector<16x16xf32>
    %cst_17 = arith.constant dense<0xFF800000> : vector<16xf32>
    %49 = vector.multi_reduction <maximumf>, %48, %cst_17 [1] : vector<16x16xf32> to vector<16xf32>
    %50 = vector.shape_cast %49 : vector<16xf32> to vector<16x1xf32>
    %51 = vector.broadcast %50 : vector<16x1xf32> to vector<16x16xf32>
    %52 = arith.subf %48, %51 : vector<16x16xf32>
    %53 = math.exp %52 : vector<16x16xf32>
    %cst_18 = arith.constant dense<0.000000e+00> : vector<16xf32>
    %54 = vector.multi_reduction <add>, %53, %cst_18 [1] : vector<16x16xf32> to vector<16xf32>
    %55 = vector.shape_cast %54 : vector<16xf32> to vector<16x1xf32>
    %56 = tpu.reciprocal %55 : vector<16x1xf32> -> vector<16x1xf32>
    %57 = vector.broadcast %56 : vector<16x1xf32> to vector<16x16xf32>
    %58 = arith.mulf %53, %57 : vector<16x16xf32>
    %cst_19 = arith.constant dense<0.000000e+00> : vector<16x8xf32>
    %59 = tpu.matmul %58, %46, %cst_19 {dimension_numbers = #tpu.dot_dimension_numbers<[1], [0], [0], [1], [0, 0, 1, 1], [], []>} : vector<16x16xf32>, vector<16x8xf32>, vector<16x8xf32> -> vector<16x8xf32>
    %60 = vector.extract_strided_slice %8 {offsets = [0, 24], sizes = [16, 8], strides = [1, 1]} : vector<16x32xf32> to vector<16x8xf32>
    %61 = vector.extract_strided_slice %9 {offsets = [0, 24], sizes = [16, 8], strides = [1, 1]} : vector<16x32xf32> to vector<16x8xf32>
    %62 = vector.extract_strided_slice %10 {offsets = [0, 24], sizes = [16, 8], strides = [1, 1]} : vector<16x32xf32> to vector<16x8xf32>
    %cst_20 = arith.constant dense<0.000000e+00> : vector<16x16xf32>
    %63 = tpu.matmul %60, %61, %cst_20 {dimension_numbers = #tpu.dot_dimension_numbers<[1], [1], [0], [0], [0, 0, 1, 0], [], []>} : vector<16x8xf32>, vector<16x8xf32>, vector<16x16xf32> -> vector<16x16xf32>
    %64 = arith.addf %63, %11 : vector<16x16xf32>
    %cst_21 = arith.constant dense<0xFF800000> : vector<16xf32>
    %65 = vector.multi_reduction <maximumf>, %64, %cst_21 [1] : vector<16x16xf32> to vector<16xf32>
    %66 = vector.shape_cast %65 : vector<16xf32> to vector<16x1xf32>
    %67 = vector.broadcast %66 : vector<16x1xf32> to vector<16x16xf32>
    %68 = arith.subf %64, %67 : vector<16x16xf32>
    %69 = math.exp %68 : vector<16x16xf32>
    %cst_22 = arith.constant dense<0.000000e+00> : vector<16xf32>
    %70 = vector.multi_reduction <add>, %69, %cst_22 [1] : vector<16x16xf32> to vector<16xf32>
    %71 = vector.shape_cast %70 : vector<16xf32> to vector<16x1xf32>
    %72 = tpu.reciprocal %71 : vector<16x1xf32> -> vector<16x1xf32>
    %73 = vector.broadcast %72 : vector<16x1xf32> to vector<16x16xf32>
    %74 = arith.mulf %69, %73 : vector<16x16xf32>
    %cst_23 = arith.constant dense<0.000000e+00> : vector<16x8xf32>
    %75 = tpu.matmul %74, %62, %cst_23 {dimension_numbers = #tpu.dot_dimension_numbers<[1], [0], [0], [1], [0, 0, 1, 1], [], []>} : vector<16x16xf32>, vector<16x8xf32>, vector<16x8xf32> -> vector<16x8xf32>
    %76 = tpu.concatenate %27, %43, %59, %75 in 1 : vector<16x8xf32>, vector<16x8xf32>, vector<16x8xf32>, vector<16x8xf32> -> vector<16x32xf32>
    %c0_24 = arith.constant 0 : index
    %c0_25 = arith.constant 0 : index
    %77 = vector.load %arg4[%c0_24, %c0_25] : memref<32x32xf32, #tpu.memory_space<vmem>>, vector<32x32xf32>
    %cst_26 = arith.constant dense<0.000000e+00> : vector<16x32xf32>
    %78 = tpu.matmul %76, %77, %cst_26 {dimension_numbers = #tpu.dot_dimension_numbers<[1], [0], [0], [1], [0, 0, 1, 1], [], []>} : vector<16x32xf32>, vector<32x32xf32>, vector<16x32xf32> -> vector<16x32xf32>
    %c0_27 = arith.constant 0 : index
    %c0_28 = arith.constant 0 : index
    %79 = vector.load %arg5[%c0_27, %c0_28] : memref<1x32xf32, #tpu.memory_space<vmem>>, vector<1x32xf32>
    %80 = vector.broadcast %79 : vector<1x32xf32> to vector<16x32xf32>
    %81 = arith.addf %78, %80 : vector<16x32xf32>
    %82 = tpu.concatenate %81, %26, %42, %58, %74 in 1 : vector<16x32xf32>, vector<16x16xf32>, vector<16x16xf32>, vector<16x16xf32>, vector<16x16xf32> -> vector<16x96xf32>
    %c0_29 = arith.constant 0 : index
    %c0_30 = arith.constant 0 : index
    %83 = vector.load %arg7[%c0_29, %c0_30] : memref<16x96xf32, #tpu.memory_space<vmem>>, vector<16x96xf32>
    tpu.vector_store %arg7[%c0_29, %c0_30], %82 {strides = array<i32>} : memref<16x96xf32, #tpu.memory_space<vmem>>, vector<16x96xf32>,
    return
  }
  func.func @transform_0(%arg0: i32) -> (i32, i32) {
    %c0_i32 = arith.constant 0 : i32
    %c0_i32_0 = arith.constant 0 : i32
    %c0_i32_1 = arith.constant 0 : i32
    return %c0_i32, %c0_i32_0 : i32, i32
  }
  func.func @transform_1(%arg0: i32) -> (i32, i32) {
    %c0_i32 = arith.constant 0 : i32
    %c0_i32_0 = arith.constant 0 : i32
    %c0_i32_1 = arith.constant 0 : i32
    return %c0_i32, %c0_i32_0 : i32, i32
  }
  func.func @transform_2(%arg0: i32) -> (i32, i32) {
    %c0_i32 = arith.constant 0 : i32
    %c0_i32_0 = arith.constant 0 : i32
    %c0_i32_1 = arith.constant 0 : i32
    return %c0_i32, %c0_i32_0 : i32, i32
  }
  func.func @transform_3(%arg0: i32) -> (i32, i32) {
    %c0_i32 = arith.constant 0 : i32
    %c0_i32_0 = arith.constant 0 : i32
    %c0_i32_1 = arith.constant 0 : i32
    return %c0_i32, %c0_i32_0 : i32, i32
  }
  func.func @transform_4(%arg0: i32) -> (i32, i32) {
    %c0_i32 = arith.constant 0 : i32
    %c0_i32_0 = arith.constant 0 : i32
    %c0_i32_1 = arith.constant 0 : i32
    return %c0_i32, %c0_i32_0 : i32, i32
  }
  func.func @transform_5(%arg0: i32) -> (i32, i32) {
    %c0_i32 = arith.constant 0 : i32
    %c0_i32_0 = arith.constant 0 : i32
    %c0_i32_1 = arith.constant 0 : i32
    return %c0_i32, %c0_i32_0 : i32, i32
  }
  func.func @transform_6(%arg0: i32) -> (i32, i32) {
    %c0_i32 = arith.constant 0 : i32
    %c0_i32_0 = arith.constant 0 : i32
    %c0_i32_1 = arith.constant 0 : i32
    return %c0_i32, %c0_i32_0 : i32, i32
  }
}

</mosaic_0001>

<llo_original>
// kernel: tpu_custom_call.1
$region0: #{tpu_custom_call.1}
  #allocation0 [shape = 'u32[]', space=smem, size = 0x4, offset = 0x4, fixed_abs, tag = 'smem constant byte address 0x4 - core index']
  #allocation1 [shape = 'u32[144,128]{1,0:T(1,128)}', space=vmem, size = 0x12000, scoped, tag = 'internal scratch']
  %s0 = inlined_call_operand.hbm [shape: f32[16,96], index: 0, kind: input, shape index: {}]
  %s1 = inlined_call_operand.hbm [shape: f32[96,96], index: 1, kind: input, shape index: {}]
  %s2 = inlined_call_operand.vmem [shape: f32[1,96], index: 2, kind: input, shape index: {}]
  %s3 = inlined_call_operand.hbm [shape: f32[32,32], index: 3, kind: input, shape index: {}]
  %s4 = inlined_call_operand.vmem [shape: f32[1,32], index: 4, kind: input, shape index: {}]
  %s5 = inlined_call_operand.vmem [shape: f32[16,16], index: 5, kind: input, shape index: {}]
  %s6 = inlined_call_operand.hbm [shape: f32[16,96], index: 6, kind: output, shape index: {}]
  %s7 = sld [smem:[#allocation0]]
  $region46: #{tpu_custom_call.1} parent=0
    _
  %s9 = ssub.s32 1, %s7
  %s10 = scalar_select 0, %s9, %s7
  $region1: #{tpu_custom_call.1} parent=0
    #allocation2 [shape = 'u8[8192]{0}', space=vmem, size = 0x2000, scoped, tag = 'input window, operand 0, single buffered']
    #allocation3 [shape = 's32[1]{0}', space=sflag, size = 0x4, scoped, tag = 'scoped memory for tpu_custom_call.1']
    #allocation4 [shape = 's32[1]{0}', space=sflag, size = 0x4, scoped, tag = 'scoped memory for tpu_custom_call.1']
    #allocation5 [shape = 'u8[49152]{0}', space=vmem, size = 0xc000, scoped, tag = 'input window, operand 1, single buffered']
    #allocation6 [shape = 's32[1]{0}', space=sflag, size = 0x4, scoped, tag = 'scoped memory for tpu_custom_call.1']
    #allocation7 [shape = 'u8[16384]{0}', space=vmem, size = 0x4000, scoped, tag = 'input window, operand 3, single buffered']
    #allocation8 [shape = 'u8[8192]{0}', space=vmem, size = 0x2000, scoped, tag = 'output window, operand 0, single buffered']
    %11 = vsyncpa [#allocation3], 0
    %12 = vsyncpa [#allocation6], 0
    %13 = vsyncpa [#allocation4], 0
    // Predicated region
    $region2: #{tpu_custom_call.1} parent=1 // pred_check
      _
    $region3: #{tpu_custom_call.1} parent=1 // pred_check_branch
      %15 = sbr.rel (0) target = $region5
    $region4: #{tpu_custom_call.1} parent=1 // pred_region
      %s17 = ssub.s32 256, 256
      %18 = vsyncadd [#allocation3], %s17
      %s19 = sshll.u32 [#allocation2], 4
      %s20 = int_to_ptr.vmem [resolvable:$true] %s19
      %25 = dma.hbm_to_vmem [thread:$0]  %s0, 256, %s20, [#allocation3], 128, 128, 8
    $region5: #{tpu_custom_call.1} parent=1 // pred_fallthru
      _
    // Predicated region
    $region6: #{tpu_custom_call.1} parent=1 // pred_check
      _
    $region7: #{tpu_custom_call.1} parent=1 // pred_check_branch
      %27 = sbr.rel (0) target = $region9
    $region8: #{tpu_custom_call.1} parent=1 // pred_region
      %s29 = ssub.s32 1536, 1536
      %30 = vsyncadd [#allocation6], %s29
      %s31 = sshll.u32 [#allocation5], 4
      %s32 = int_to_ptr.vmem [resolvable:$true] %s31
      %37 = dma.hbm_to_vmem [thread:$0]  %s1, 1536, %s32, [#allocation6], 128, 128, 8
    $region9: #{tpu_custom_call.1} parent=1 // pred_fallthru
      _
    // Predicated region
    $region10: #{tpu_custom_call.1} parent=1 // pred_check
      _
    $region11: #{tpu_custom_call.1} parent=1 // pred_check_branch
      %39 = sbr.rel (0) target = $region13
    $region12: #{tpu_custom_call.1} parent=1 // pred_region
      _
    $region13: #{tpu_custom_call.1} parent=1 // pred_fallthru
      _
    // Predicated region
    $region14: #{tpu_custom_call.1} parent=1 // pred_check
      _
    $region15: #{tpu_custom_call.1} parent=1 // pred_check_branch
      %41 = sbr.rel (0) target = $region17
    $region16: #{tpu_custom_call.1} parent=1 // pred_region
      %s43 = ssub.s32 512, 512
      %44 = vsyncadd [#allocation6], %s43
      %s45 = sshll.u32 [#allocation7], 4
      %s46 = int_to_ptr.vmem [resolvable:$true] %s45
      %51 = dma.hbm_to_vmem [thread:$0]  %s3, 512, %s46, [#allocation6], 128, 128, 8
    $region17: #{tpu_custom_call.1} parent=1 // pred_fallthru
      _
    // Predicated region
    $region18: #{tpu_custom_call.1} parent=1 // pred_check
      _
    $region19: #{tpu_custom_call.1} parent=1 // pred_check_branch
      %53 = sbr.rel (0) target = $region21
    $region20: #{tpu_custom_call.1} parent=1 // pred_region
      _
    $region21: #{tpu_custom_call.1} parent=1 // pred_fallthru
      _
    // Predicated region
    $region22: #{tpu_custom_call.1} parent=1 // pred_check
      _
    $region23: #{tpu_custom_call.1} parent=1 // pred_check_branch
      %55 = sbr.rel (0) target = $region25
    $region24: #{tpu_custom_call.1} parent=1 // pred_region
      _
    $region25: #{tpu_custom_call.1} parent=1 // pred_fallthru
      _
    // Predicated region
    $region26: #{tpu_custom_call.1} parent=1 // pred_check
      _
    $region27: #{tpu_custom_call.1} parent=1 // pred_check_branch
      %57 = sbr.rel (0) target = $region29
    $region28: #{tpu_custom_call.1} parent=1 // pred_region
      %58 = dma.done [#allocation3], 256
    $region29: #{tpu_custom_call.1} parent=1 // pred_fallthru
      _
    // Predicated region
    $region30: #{tpu_custom_call.1} parent=1 // pred_check
      _
    $region31: #{tpu_custom_call.1} parent=1 // pred_check_branch
      %60 = sbr.rel (0) target = $region33
    $region32: #{tpu_custom_call.1} parent=1 // pred_region
      %61 = dma.done [#allocation6], 1536
    $region33: #{tpu_custom_call.1} parent=1 // pred_fallthru
      _
    // Predicated region
    $region34: #{tpu_custom_call.1} parent=1 // pred_check
      _
    $region35: #{tpu_custom_call.1} parent=1 // pred_check_branch
      %63 = sbr.rel (0) target = $region37
    $region36: #{tpu_custom_call.1} parent=1 // pred_region
      %64 = dma.done [#allocation6], 512
    $region37: #{tpu_custom_call.1} parent=1 // pred_fallthru
      _
    %v65 = vld [vmem:[#allocation2] sm:$0xff]
    %v66 = vld [vmem:[#allocation2 + $0x8] sm:$0xff]
    %v67 = vld [vmem:[#allocation5] sm:$0xff]
    %v68 = vld [vmem:[#allocation5 + $0x8] sm:$0xff]
    %v69 = vld [vmem:[#allocation5 + $0x10] sm:$0xff]
    %v70 = vld [vmem:[#allocation5 + $0x18] sm:$0xff]
    %v71 = vld [vmem:[#allocation5 + $0x20] sm:$0xff]
    %v72 = vld [vmem:[#allocation5 + $0x28] sm:$0xff]
    %v73 = vld [vmem:[#allocation5 + $0x30] sm:$0xff]
    %v74 = vld [vmem:[#allocation5 + $0x38] sm:$0xff]
    %v75 = vld [vmem:[#allocation5 + $0x40] sm:$0xff]
    %v76 = vld [vmem:[#allocation5 + $0x48] sm:$0xff]
    %v77 = vld [vmem:[#allocation5 + $0x50] sm:$0xff]
    %v78 = vld [vmem:[#allocation5 + $0x58] sm:$0xff]
    %v79 = vld [vmem:[%s2] sm:$0x1]
    %v81 = vlaneseq
    %v82 = vshrl.u32 %v81, 7
    %v83 = vsub.s32 0, %v82
    %v84 = vrot.slane %v79, %v83
    %vm86 = vcmask 785408
    %v88 = vsel %vm86, %v65, 0
    %v91 = vsel %vm86, %v66, 0
    %93 = vmatprep.subr.mxu0 0.0
    %94 = vmatpush1.msra.mxu0 %v67
    %95 = vmatprep.subr.mxu0 0.0
    %96 = vmatpush1.msra.mxu0 %v68
    %97 = vmatprep.subr.mxu0 0.0
    %98 = vmatpush1.msra.mxu0 %v69
    %99 = vmatprep.subr.mxu0 0.0
    %100 = vmatpush1.msra.mxu0 %v70
    %101 = vmatprep.subr.mxu0 0.0
    %102 = vmatpush1.msra.mxu0 %v71
    %103 = vmatprep.subr.mxu0 0.0
    %104 = vmatpush1.msra.mxu0 %v72
    %105 = vmatprep.subr.mxu0 0.0
    %106 = vmatpush1.msra.mxu0 %v73
    %107 = vmatprep.subr.mxu0 0.0
    %108 = vmatpush1.msra.mxu0 %v74
    %109 = vmatprep.subr.mxu0 0.0
    %110 = vmatpush1.msra.mxu0 %v75
    %111 = vmatprep.subr.mxu0 0.0
    %112 = vmatpush1.msra.mxu0 %v76
    %113 = vmatprep.subr.mxu0 0.0
    %114 = vmatpush1.msra.mxu0 %v77
    %115 = vmatprep.subr.mxu0 0.0
    %116 = vmatpush1.msra.mxu0 %v78
    %117 = vmatprep.subr.mxu0 0.0
    %118 = vmatpush1.msra.mxu0 0.0
    %119 = vmatprep.subr.mxu0 0.0
    %120 = vmatpush1.msra.mxu0 0.0
    %121 = vmatprep.subr.mxu0 0.0
    %122 = vmatpush1.msra.mxu0 0.0
    %123 = vmatprep.subr.mxu0 0.0
    %124 = vmatpush1.msra.mxu0 0.0
    %125 = vmatprep.subr.mxu0 0.0
    %126 = vmatpush1.msra.mxu0 0.0
    %127 = vmatprep.subr.mxu0 0.0
    %128 = vmatpush1.msra.mxu0 0.0
    %129 = vmatprep.subr.mxu0 0.0
    %130 = vmatpush1.msra.mxu0 0.0
    %131 = vmatprep.subr.mxu0 0.0
    %132 = vmatpush1.msra.mxu0 0.0
    %133 = vmatprep.subr.mxu0 0.0
    %134 = vmatpush1.msra.mxu0 0.0
    %135 = vmatprep.subr.mxu0 0.0
    %136 = vmatpush1.msra.mxu0 0.0
    %137 = vmatprep.subr.mxu0 0.0
    %138 = vmatpush1.msra.mxu0 0.0
    %139 = vmatprep.subr.mxu0 0.0
    %140 = vmatpush1.msra.mxu0 0.0
    %141 = vmatprep.subr.mxu0 0.0
    %142 = vmatpush1.msra.mxu0 0.0
    %143 = vmatprep.subr.mxu0 0.0
    %144 = vmatpush1.msra.mxu0 0.0
    %145 = vmatprep.subr.mxu0 0.0
    %146 = vmatpush1.msra.mxu0 0.0
    %147 = vmatprep.subr.mxu0 0.0
    %148 = vmatpush1.msra.mxu0 0.0
    %149 = vmatprep.subr.mxu0 0.0
    %150 = vmatpush1.msra.mxu0 0.0
    %151 = vmatprep.subr.mxu0 0.0
    %152 = vmatpush1.msra.mxu0 0.0
    %153 = vmatprep.subr.mxu0 0.0
    %154 = vmatpush1.msra.mxu0 0.0
    %155 = vmatprep.subr.mxu0 0.0
    %156 = vmatpush1.msra.mxu0 0.0
    %157 = vmatprep.mubr.f32.mxu0 0.0
    %158 = vmatmul.mubr.f32.gmra.mrb[0].mxu0 %v88
    %v159 = vpop.f32.mrb[0].mxu0
    %v160 = vadd.f32 %v84, %v159
    %v161 = vpop.f32.mrb[0].mxu0
    %162 = vmatprep.mubr.f32.mxu0 0.0
    %163 = vmatmul.mubr.f32.gmra.mrb[0].mxu0 %v91
    %v164 = vpop.f32.mrb[0].mxu0
    %v165 = vadd.f32 %v84, %v164
    %v166 = vpop.f32.mrb[0].mxu0
    %167 = vdwg.mxu0
    %v168 = vmul.f32 %v160, 0.35355338
    %v169 = vmul.f32 %v165, 0.35355338
    %v170 = vld [vmem:[%s5] sm:$0xff]
    %v171 = vld [vmem:[%s5 + $0x8] sm:$0xff]
    %174 = vrot.lane.b32.xlu0 %v160, 96
    %v175 = vpop.permute.xlu0 %174
    %176 = vrot.lane.b32.xlu0 %v165, 96
    %v177 = vpop.permute.xlu0 %176
    %vm178 = vcmask 64512
    %v180 = vsel %vm178, %v168, 0
    %v183 = vsel %vm178, %v169, 0
    %v185 = vsel %vm178, %v175, 0
    %v187 = vsel %vm178, %v177, 0
    %189 = vmatprep.subr.mxu0 0.0
    %190 = vmatpush1.xpose.msra.mxu0 %v185
    %191 = vmatprep.subr.mxu0 0.0
    %192 = vmatpush1.xpose.msra.mxu0 %v187
    %193 = vmatprep.subr.mxu0 0.0
    %194 = vmatpush1.xpose.msra.mxu0 0.0
    %195 = vmatprep.subr.mxu0 0.0
    %196 = vmatpush1.xpose.msra.mxu0 0.0
    %197 = vmatprep.subr.mxu0 0.0
    %198 = vmatpush1.xpose.msra.mxu0 0.0
    %199 = vmatprep.subr.mxu0 0.0
    %200 = vmatpush1.xpose.msra.mxu0 0.0
    %201 = vmatprep.subr.mxu0 0.0
    %202 = vmatpush1.xpose.msra.mxu0 0.0
    %203 = vmatprep.subr.mxu0 0.0
    %204 = vmatpush1.xpose.msra.mxu0 0.0
    %205 = vmatprep.subr.mxu0 0.0
    %206 = vmatpush1.xpose.msra.mxu0 0.0
    %207 = vmatprep.subr.mxu0 0.0
    %208 = vmatpush1.xpose.msra.mxu0 0.0
    %209 = vmatprep.subr.mxu0 0.0
    %210 = vmatpush1.xpose.msra.mxu0 0.0
    %211 = vmatprep.subr.mxu0 0.0
    %212 = vmatpush1.xpose.msra.mxu0 0.0
    %213 = vmatprep.subr.mxu0 0.0
    %214 = vmatpush1.xpose.msra.mxu0 0.0
    %215 = vmatprep.subr.mxu0 0.0
    %216 = vmatpush1.xpose.msra.mxu0 0.0
    %217 = vmatprep.subr.mxu0 0.0
    %218 = vmatpush1.xpose.msra.mxu0 0.0
    %219 = vmatprep.subr.mxu0 0.0
    %220 = vmatpush1.xpose.msra.mxu0 0.0
    %221 = vmatprep.subr.mxu0 0.0
    %222 = vmatpush1.xpose.msra.mxu0 0.0
    %223 = vmatprep.subr.mxu0 0.0
    %224 = vmatpush1.xpose.msra.mxu0 0.0
    %225 = vmatprep.subr.mxu0 0.0
    %226 = vmatpush1.xpose.msra.mxu0 0.0
    %227 = vmatprep.subr.mxu0 0.0
    %228 = vmatpush1.xpose.msra.mxu0 0.0
    %229 = vmatprep.subr.mxu0 0.0
    %230 = vmatpush1.xpose.msra.mxu0 0.0
    %231 = vmatprep.subr.mxu0 0.0
    %232 = vmatpush1.xpose.msra.mxu0 0.0
    %233 = vmatprep.subr.mxu0 0.0
    %234 = vmatpush1.xpose.msra.mxu0 0.0
    %235 = vmatprep.subr.mxu0 0.0
    %236 = vmatpush1.xpose.msra.mxu0 0.0
    %237 = vmatprep.subr.mxu0 0.0
    %238 = vmatpush1.xpose.msra.mxu0 0.0
    %239 = vmatprep.subr.mxu0 0.0
    %240 = vmatpush1.xpose.msra.mxu0 0.0
    %241 = vmatprep.subr.mxu0 0.0
    %242 = vmatpush1.xpose.msra.mxu0 0.0
    %243 = vmatprep.subr.mxu0 0.0
    %244 = vmatpush1.xpose.msra.mxu0 0.0
    %245 = vmatprep.subr.mxu0 0.0
    %246 = vmatpush1.xpose.msra.mxu0 0.0
    %247 = vmatprep.subr.mxu0 0.0
    %248 = vmatpush1.xpose.msra.mxu0 0.0
    %249 = vmatprep.subr.mxu0 0.0
    %250 = vmatpush1.xpose.msra.mxu0 0.0
    %251 = vmatprep.subr.mxu0 0.0
    %252 = vmatpush1.xpose.msra.mxu0 0.0
    %253 = vmatprep.mubr.f32.mxu0 0.0
    %254 = vmatmul.mubr.f32.gmra.mrb[0].mxu0 %v180
    %v255 = vpop.f32.mrb[0].mxu0
    %v256 = vadd.f32 %v170, %v255
    %v257 = vpop.f32.mrb[0].mxu0
    %258 = vmatprep.mubr.f32.mxu0 0.0
    %259 = vmatmul.mubr.f32.gmra.mrb[0].mxu0 %v183
    %v260 = vpop.f32.mrb[0].mxu0
    %v261 = vadd.f32 %v171, %v260
    %v262 = vpop.f32.mrb[0].mxu0
    %263 = vdwg.mxu0
    %vm264 = vcmask 130048
    %v265 = vsel %vm264, %v256, -inf
    %266 = vmax.xlane.f32.xlu0 %v265
    %v267 = vpop.xlane.xlu0 %266
    %v268 = vsel %vm264, %v261, -inf
    %269 = vmax.xlane.f32.xlu0 %v268
    %v270 = vpop.xlane.xlu0 %269
    %v271 = vsub.f32 %v256, %v267
    %v272 = vsub.f32 %v261, %v270
    %v273 = vmul.f32 %v271, 1.442695
    %v274 = vpow.pop %v273
    %v275 = vmul.f32 %v272, 1.442695
    %v276 = vpow.pop %v275
    %v277 = vsel %vm264, %v274, 0.0
    %278 = vadd.xlane.f32.xlu0 %v277
    %v279 = vpop.xlane.xlu0 %278
    %v280 = vsel %vm264, %v276, 0.0
    %281 = vadd.xlane.f32.xlu0 %v280
    %v282 = vpop.xlane.xlu0 %281
    %v283 = vrcp.pop %v279
    %v284 = vrcp.pop %v282
    %v285 = vmul.f32 %v274, %v283
    %v286 = vmul.f32 %v276, %v284
    %287 = vrot.lane.b32.xlu0 %v160, 64
    %v288 = vpop.permute.xlu0 %287
    %289 = vrot.lane.b32.xlu0 %v165, 64
    %v290 = vpop.permute.xlu0 %289
    %v294 = vsel %vm264, %v285, 0
    %v297 = vsel %vm264, %v286, 0
    %299 = vmatprep.subr.mxu0 0.0
    %300 = vmatpush1.msra.mxu0 %v288
    %301 = vmatprep.subr.mxu0 0.0
    %302 = vmatpush1.msra.mxu0 %v290
    %303 = vmatprep.subr.mxu0 0.0
    %304 = vmatpush1.msra.mxu0 0.0
    %305 = vmatprep.subr.mxu0 0.0
    %306 = vmatpush1.msra.mxu0 0.0
    %307 = vmatprep.subr.mxu0 0.0
    %308 = vmatpush1.msra.mxu0 0.0
    %309 = vmatprep.subr.mxu0 0.0
    %310 = vmatpush1.msra.mxu0 0.0
    %311 = vmatprep.subr.mxu0 0.0
    %312 = vmatpush1.msra.mxu0 0.0
    %313 = vmatprep.subr.mxu0 0.0
    %314 = vmatpush1.msra.mxu0 0.0
    %315 = vmatprep.subr.mxu0 0.0
    %316 = vmatpush1.msra.mxu0 0.0
    %317 = vmatprep.subr.mxu0 0.0
    %318 = vmatpush1.msra.mxu0 0.0
    %319 = vmatprep.subr.mxu0 0.0
    %320 = vmatpush1.msra.mxu0 0.0
    %321 = vmatprep.subr.mxu0 0.0
    %322 = vmatpush1.msra.mxu0 0.0
    %323 = vmatprep.subr.mxu0 0.0
    %324 = vmatpush1.msra.mxu0 0.0
    %325 = vmatprep.subr.mxu0 0.0
    %326 = vmatpush1.msra.mxu0 0.0
    %327 = vmatprep.subr.mxu0 0.0
    %328 = vmatpush1.msra.mxu0 0.0
    %329 = vmatprep.subr.mxu0 0.0
    %330 = vmatpush1.msra.mxu0 0.0
    %331 = vmatprep.subr.mxu0 0.0
    %332 = vmatpush1.msra.mxu0 0.0
    %333 = vmatprep.subr.mxu0 0.0
    %334 = vmatpush1.msra.mxu0 0.0
    %335 = vmatprep.subr.mxu0 0.0
    %336 = vmatpush1.msra.mxu0 0.0
    %337 = vmatprep.subr.mxu0 0.0
    %338 = vmatpush1.msra.mxu0 0.0
    %339 = vmatprep.subr.mxu0 0.0
    %340 = vmatpush1.msra.mxu0 0.0
    %341 = vmatprep.subr.mxu0 0.0
    %342 = vmatpush1.msra.mxu0 0.0
    %343 = vmatprep.subr.mxu0 0.0
    %344 = vmatpush1.msra.mxu0 0.0
    %345 = vmatprep.subr.mxu0 0.0
    %346 = vmatpush1.msra.mxu0 0.0
    %347 = vmatprep.subr.mxu0 0.0
    %348 = vmatpush1.msra.mxu0 0.0
    %349 = vmatprep.subr.mxu0 0.0
    %350 = vmatpush1.msra.mxu0 0.0
    %351 = vmatprep.subr.mxu0 0.0
    %352 = vmatpush1.msra.mxu0 0.0
    %353 = vmatprep.subr.mxu0 0.0
    %354 = vmatpush1.msra.mxu0 0.0
    %355 = vmatprep.subr.mxu0 0.0
    %356 = vmatpush1.msra.mxu0 0.0
    %357 = vmatprep.subr.mxu0 0.0
    %358 = vmatpush1.msra.mxu0 0.0
    %359 = vmatprep.subr.mxu0 0.0
    %360 = vmatpush1.msra.mxu0 0.0
    %361 = vmatprep.subr.mxu0 0.0
    %362 = vmatpush1.msra.mxu0 0.0
    %363 = vmatprep.mubr.f32.mxu0 0.0
    %364 = vmatmul.mubr.f32.gmra.mrb[0].mxu0 %v294
    %v365 = vpop.f32.mrb[0].mxu0
    %v366 = vadd.f32 0.0, %v365
    %v367 = vpop.f32.mrb[0].mxu0
    %368 = vmatprep.mubr.f32.mxu0 0.0
    %369 = vmatmul.mubr.f32.gmra.mrb[0].mxu0 %v297
    %v370 = vpop.f32.mrb[0].mxu0
    %v371 = vadd.f32 0.0, %v370
    %v372 = vpop.f32.mrb[0].mxu0
    %373 = vdwg.mxu0
    %374 = vrot.lane.b32.xlu0 %v168, 120
    %v375 = vpop.permute.xlu0 %374
    %376 = vrot.lane.b32.xlu0 %v169, 120
    %v377 = vpop.permute.xlu0 %376
    %378 = vrot.lane.b32.xlu0 %v160, 88
    %v379 = vpop.permute.xlu0 %378
    %380 = vrot.lane.b32.xlu0 %v165, 88
    %v381 = vpop.permute.xlu0 %380
    %v382 = vsel %vm178, %v375, 0
    %v384 = vsel %vm178, %v377, 0
    %v386 = vsel %vm178, %v379, 0
    %v388 = vsel %vm178, %v381, 0
    %390 = vmatprep.subr.mxu0 0.0
    %391 = vmatpush1.xpose.msra.mxu0 %v386
    %392 = vmatprep.subr.mxu0 0.0
    %393 = vmatpush1.xpose.msra.mxu0 %v388
    %394 = vmatprep.subr.mxu0 0.0
    %395 = vmatpush1.xpose.msra.mxu0 0.0
    %396 = vmatprep.subr.mxu0 0.0
    %397 = vmatpush1.xpose.msra.mxu0 0.0
    %398 = vmatprep.subr.mxu0 0.0
    %399 = vmatpush1.xpose.msra.mxu0 0.0
    %400 = vmatprep.subr.mxu0 0.0
    %401 = vmatpush1.xpose.msra.mxu0 0.0
    %402 = vmatprep.subr.mxu0 0.0
    %403 = vmatpush1.xpose.msra.mxu0 0.0
    %404 = vmatprep.subr.mxu0 0.0
    %405 = vmatpush1.xpose.msra.mxu0 0.0
    %406 = vmatprep.subr.mxu0 0.0
    %407 = vmatpush1.xpose.msra.mxu0 0.0
    %408 = vmatprep.subr.mxu0 0.0
    %409 = vmatpush1.xpose.msra.mxu0 0.0
    %410 = vmatprep.subr.mxu0 0.0
    %411 = vmatpush1.xpose.msra.mxu0 0.0
    %412 = vmatprep.subr.mxu0 0.0
    %413 = vmatpush1.xpose.msra.mxu0 0.0
    %414 = vmatprep.subr.mxu0 0.0
    %415 = vmatpush1.xpose.msra.mxu0 0.0
    %416 = vmatprep.subr.mxu0 0.0
    %417 = vmatpush1.xpose.msra.mxu0 0.0
    %418 = vmatprep.subr.mxu0 0.0
    %419 = vmatpush1.xpose.msra.mxu0 0.0
    %420 = vmatprep.subr.mxu0 0.0
    %421 = vmatpush1.xpose.msra.mxu0 0.0
    %422 = vmatprep.subr.mxu0 0.0
    %423 = vmatpush1.xpose.msra.mxu0 0.0
    %424 = vmatprep.subr.mxu0 0.0
    %425 = vmatpush1.xpose.msra.mxu0 0.0
    %426 = vmatprep.subr.mxu0 0.0
    %427 = vmatpush1.xpose.msra.mxu0 0.0
    %428 = vmatprep.subr.mxu0 0.0
    %429 = vmatpush1.xpose.msra.mxu0 0.0
    %430 = vmatprep.subr.mxu0 0.0
    %431 = vmatpush1.xpose.msra.mxu0 0.0
    %432 = vmatprep.subr.mxu0 0.0
    %433 = vmatpush1.xpose.msra.mxu0 0.0
    %434 = vmatprep.subr.mxu0 0.0
    %435 = vmatpush1.xpose.msra.mxu0 0.0
    %436 = vmatprep.subr.mxu0 0.0
    %437 = vmatpush1.xpose.msra.mxu0 0.0
    %438 = vmatprep.subr.mxu0 0.0
    %439 = vmatpush1.xpose.msra.mxu0 0.0
    %440 = vmatprep.subr.mxu0 0.0
    %441 = vmatpush1.xpose.msra.mxu0 0.0
    %442 = vmatprep.subr.mxu0 0.0
    %443 = vmatpush1.xpose.msra.mxu0 0.0
    %444 = vmatprep.subr.mxu0 0.0
    %445 = vmatpush1.xpose.msra.mxu0 0.0
    %446 = vmatprep.subr.mxu0 0.0
    %447 = vmatpush1.xpose.msra.mxu0 0.0
    %448 = vmatprep.subr.mxu0 0.0
    %449 = vmatpush1.xpose.msra.mxu0 0.0
    %450 = vmatprep.subr.mxu0 0.0
    %451 = vmatpush1.xpose.msra.mxu0 0.0
    %452 = vmatprep.subr.mxu0 0.0
    %453 = vmatpush1.xpose.msra.mxu0 0.0
    %454 = vmatprep.mubr.f32.mxu0 0.0
    %455 = vmatmul.mubr.f32.gmra.mrb[0].mxu0 %v382
    %v456 = vpop.f32.mrb[0].mxu0
    %v457 = vadd.f32 %v170, %v456
    %v458 = vpop.f32.mrb[0].mxu0
    %459 = vmatprep.mubr.f32.mxu0 0.0
    %460 = vmatmul.mubr.f32.gmra.mrb[0].mxu0 %v384
    %v461 = vpop.f32.mrb[0].mxu0
    %v462 = vadd.f32 %v171, %v461
    %v463 = vpop.f32.mrb[0].mxu0
    %464 = vdwg.mxu0
    %v465 = vsel %vm264, %v457, -inf
    %466 = vmax.xlane.f32.xlu0 %v465
    %v467 = vpop.xlane.xlu0 %466
    %v468 = vsel %vm264, %v462, -inf
    %469 = vmax.xlane.f32.xlu0 %v468
    %v470 = vpop.xlane.xlu0 %469
    %v471 = vsub.f32 %v457, %v467
    %v472 = vsub.f32 %v462, %v470
    %v473 = vmul.f32 %v471, 1.442695
    %v474 = vpow.pop %v473
    %v475 = vmul.f32 %v472, 1.442695
    %v476 = vpow.pop %v475
    %v477 = vsel %vm264, %v474, 0.0
    %478 = vadd.xlane.f32.xlu0 %v477
    %v479 = vpop.xlane.xlu0 %478
    %v480 = vsel %vm264, %v476, 0.0
    %481 = vadd.xlane.f32.xlu0 %v480
    %v482 = vpop.xlane.xlu0 %481
    %v483 = vrcp.pop %v479
    %v484 = vrcp.pop %v482
    %v485 = vmul.f32 %v474, %v483
    %v486 = vmul.f32 %v476, %v484
    %487 = vrot.lane.b32.xlu0 %v160, 56
    %v488 = vpop.permute.xlu0 %487
    %489 = vrot.lane.b32.xlu0 %v165, 56
    %v490 = vpop.permute.xlu0 %489
    %v494 = vsel %vm264, %v485, 0
    %v497 = vsel %vm264, %v486, 0
    %499 = vmatprep.subr.mxu0 0.0
    %500 = vmatpush1.msra.mxu0 %v488
    %501 = vmatprep.subr.mxu0 0.0
    %502 = vmatpush1.msra.mxu0 %v490
    %503 = vmatprep.subr.mxu0 0.0
    %504 = vmatpush1.msra.mxu0 0.0
    %505 = vmatprep.subr.mxu0 0.0
    %506 = vmatpush1.msra.mxu0 0.0
    %507 = vmatprep.subr.mxu0 0.0
    %508 = vmatpush1.msra.mxu0 0.0
    %509 = vmatprep.subr.mxu0 0.0
    %510 = vmatpush1.msra.mxu0 0.0
    %511 = vmatprep.subr.mxu0 0.0
    %512 = vmatpush1.msra.mxu0 0.0
    %513 = vmatprep.subr.mxu0 0.0
    %514 = vmatpush1.msra.mxu0 0.0
    %515 = vmatprep.subr.mxu0 0.0
    %516 = vmatpush1.msra.mxu0 0.0
    %517 = vmatprep.subr.mxu0 0.0
    %518 = vmatpush1.msra.mxu0 0.0
    %519 = vmatprep.subr.mxu0 0.0
    %520 = vmatpush1.msra.mxu0 0.0
    %521 = vmatprep.subr.mxu0 0.0
    %522 = vmatpush1.msra.mxu0 0.0
    %523 = vmatprep.subr.mxu0 0.0
    %524 = vmatpush1.msra.mxu0 0.0
    %525 = vmatprep.subr.mxu0 0.0
    %526 = vmatpush1.msra.mxu0 0.0
    %527 = vmatprep.subr.mxu0 0.0
    %528 = vmatpush1.msra.mxu0 0.0
    %529 = vmatprep.subr.mxu0 0.0
    %530 = vmatpush1.msra.mxu0 0.0
    %531 = vmatprep.subr.mxu0 0.0
    %532 = vmatpush1.msra.mxu0 0.0
    %533 = vmatprep.subr.mxu0 0.0
    %534 = vmatpush1.msra.mxu0 0.0
    %535 = vmatprep.subr.mxu0 0.0
    %536 = vmatpush1.msra.mxu0 0.0
    %537 = vmatprep.subr.mxu0 0.0
    %538 = vmatpush1.msra.mxu0 0.0
    %539 = vmatprep.subr.mxu0 0.0
    %540 = vmatpush1.msra.mxu0 0.0
    %541 = vmatprep.subr.mxu0 0.0
    %542 = vmatpush1.msra.mxu0 0.0
    %543 = vmatprep.subr.mxu0 0.0
    %544 = vmatpush1.msra.mxu0 0.0
    %545 = vmatprep.subr.mxu0 0.0
    %546 = vmatpush1.msra.mxu0 0.0
    %547 = vmatprep.subr.mxu0 0.0
    %548 = vmatpush1.msra.mxu0 0.0
    %549 = vmatprep.subr.mxu0 0.0
    %550 = vmatpush1.msra.mxu0 0.0
    %551 = vmatprep.subr.mxu0 0.0
    %552 = vmatpush1.msra.mxu0 0.0
    %553 = vmatprep.subr.mxu0 0.0
    %554 = vmatpush1.msra.mxu0 0.0
    %555 = vmatprep.subr.mxu0 0.0
    %556 = vmatpush1.msra.mxu0 0.0
    %557 = vmatprep.subr.mxu0 0.0
    %558 = vmatpush1.msra.mxu0 0.0
    %559 = vmatprep.subr.mxu0 0.0
    %560 = vmatpush1.msra.mxu0 0.0
    %561 = vmatprep.subr.mxu0 0.0
    %562 = vmatpush1.msra.mxu0 0.0
    %563 = vmatprep.mubr.f32.mxu0 0.0
    %564 = vmatmul.mubr.f32.gmra.mrb[0].mxu0 %v494
    %v565 = vpop.f32.mrb[0].mxu0
    %v566 = vadd.f32 0.0, %v565
    %v567 = vpop.f32.mrb[0].mxu0
    %568 = vmatprep.mubr.f32.mxu0 0.0
    %569 = vmatmul.mubr.f32.gmra.mrb[0].mxu0 %v497
    %v570 = vpop.f32.mrb[0].mxu0
    %v571 = vadd.f32 0.0, %v570
    %v572 = vpop.f32.mrb[0].mxu0
    %573 = vdwg.mxu0
    %574 = vrot.lane.b32.xlu0 %v168, 112
    %v575 = vpop.permute.xlu0 %574
    %576 = vrot.lane.b32.xlu0 %v169, 112
    %v577 = vpop.permute.xlu0 %576
    %578 = vrot.lane.b32.xlu0 %v160, 80
    %v579 = vpop.permute.xlu0 %578
    %580 = vrot.lane.b32.xlu0 %v165, 80
    %v581 = vpop.permute.xlu0 %580
    %v582 = vsel %vm178, %v575, 0
    %v584 = vsel %vm178, %v577, 0
    %v586 = vsel %vm178, %v579, 0
    %v588 = vsel %vm178, %v581, 0
    %590 = vmatprep.subr.mxu0 0.0
    %591 = vmatpush1.xpose.msra.mxu0 %v586
    %592 = vmatprep.subr.mxu0 0.0
    %593 = vmatpush1.xpose.msra.mxu0 %v588
    %594 = vmatprep.subr.mxu0 0.0
    %595 = vmatpush1.xpose.msra.mxu0 0.0
    %596 = vmatprep.subr.mxu0 0.0
    %597 = vmatpush1.xpose.msra.mxu0 0.0
    %598 = vmatprep.subr.mxu0 0.0
    %599 = vmatpush1.xpose.msra.mxu0 0.0
    %600 = vmatprep.subr.mxu0 0.0
    %601 = vmatpush1.xpose.msra.mxu0 0.0
    %602 = vmatprep.subr.mxu0 0.0
    %603 = vmatpush1.xpose.msra.mxu0 0.0
    %604 = vmatprep.subr.mxu0 0.0
    %605 = vmatpush1.xpose.msra.mxu0 0.0
    %606 = vmatprep.subr.mxu0 0.0
    %607 = vmatpush1.xpose.msra.mxu0 0.0
    %608 = vmatprep.subr.mxu0 0.0
    %609 = vmatpush1.xpose.msra.mxu0 0.0
    %610 = vmatprep.subr.mxu0 0.0
    %611 = vmatpush1.xpose.msra.mxu0 0.0
    %612 = vmatprep.subr.mxu0 0.0
    %613 = vmatpush1.xpose.msra.mxu0 0.0
    %614 = vmatprep.subr.mxu0 0.0
    %615 = vmatpush1.xpose.msra.mxu0 0.0
    %616 = vmatprep.subr.mxu0 0.0
    %617 = vmatpush1.xpose.msra.mxu0 0.0
    %618 = vmatprep.subr.mxu0 0.0
    %619 = vmatpush1.xpose.msra.mxu0 0.0
    %620 = vmatprep.subr.mxu0 0.0
    %621 = vmatpush1.xpose.msra.mxu0 0.0
    %622 = vmatprep.subr.mxu0 0.0
    %623 = vmatpush1.xpose.msra.mxu0 0.0
    %624 = vmatprep.subr.mxu0 0.0
    %625 = vmatpush1.xpose.msra.mxu0 0.0
    %626 = vmatprep.subr.mxu0 0.0
    %627 = vmatpush1.xpose.msra.mxu0 0.0
    %628 = vmatprep.subr.mxu0 0.0
    %629 = vmatpush1.xpose.msra.mxu0 0.0
    %630 = vmatprep.subr.mxu0 0.0
    %631 = vmatpush1.xpose.msra.mxu0 0.0
    %632 = vmatprep.subr.mxu0 0.0
    %633 = vmatpush1.xpose.msra.mxu0 0.0
    %634 = vmatprep.subr.mxu0 0.0
    %635 = vmatpush1.xpose.msra.mxu0 0.0
    %636 = vmatprep.subr.mxu0 0.0
    %637 = vmatpush1.xpose.msra.mxu0 0.0
    %638 = vmatprep.subr.mxu0 0.0
    %639 = vmatpush1.xpose.msra.mxu0 0.0
    %640 = vmatprep.subr.mxu0 0.0
    %641 = vmatpush1.xpose.msra.mxu0 0.0
    %642 = vmatprep.subr.mxu0 0.0
    %643 = vmatpush1.xpose.msra.mxu0 0.0
    %644 = vmatprep.subr.mxu0 0.0
    %645 = vmatpush1.xpose.msra.mxu0 0.0
    %646 = vmatprep.subr.mxu0 0.0
    %647 = vmatpush1.xpose.msra.mxu0 0.0
    %648 = vmatprep.subr.mxu0 0.0
    %649 = vmatpush1.xpose.msra.mxu0 0.0
    %650 = vmatprep.subr.mxu0 0.0
    %651 = vmatpush1.xpose.msra.mxu0 0.0
    %652 = vmatprep.subr.mxu0 0.0
    %653 = vmatpush1.xpose.msra.mxu0 0.0
    %654 = vmatprep.mubr.f32.mxu0 0.0
    %655 = vmatmul.mubr.f32.gmra.mrb[0].mxu0 %v582
    %v656 = vpop.f32.mrb[0].mxu0
    %v657 = vadd.f32 %v170, %v656
    %v658 = vpop.f32.mrb[0].mxu0
    %659 = vmatprep.mubr.f32.mxu0 0.0
    %660 = vmatmul.mubr.f32.gmra.mrb[0].mxu0 %v584
    %v661 = vpop.f32.mrb[0].mxu0
    %v662 = vadd.f32 %v171, %v661
    %v663 = vpop.f32.mrb[0].mxu0
    %664 = vdwg.mxu0
    %v665 = vsel %vm264, %v657, -inf
    %666 = vmax.xlane.f32.xlu0 %v665
    %v667 = vpop.xlane.xlu0 %666
    %v668 = vsel %vm264, %v662, -inf
    %669 = vmax.xlane.f32.xlu0 %v668
    %v670 = vpop.xlane.xlu0 %669
    %v671 = vsub.f32 %v657, %v667
    %v672 = vsub.f32 %v662, %v670
    %v673 = vmul.f32 %v671, 1.442695
    %v674 = vpow.pop %v673
    %v675 = vmul.f32 %v672, 1.442695
    %v676 = vpow.pop %v675
    %v677 = vsel %vm264, %v674, 0.0
    %678 = vadd.xlane.f32.xlu0 %v677
    %v679 = vpop.xlane.xlu0 %678
    %v680 = vsel %vm264, %v676, 0.0
    %681 = vadd.xlane.f32.xlu0 %v680
    %v682 = vpop.xlane.xlu0 %681
    %v683 = vrcp.pop %v679
    %v684 = vrcp.pop %v682
    %v685 = vmul.f32 %v674, %v683
    %v686 = vmul.f32 %v676, %v684
    %687 = vrot.lane.b32.xlu0 %v160, 48
    %v688 = vpop.permute.xlu0 %687
    %689 = vrot.lane.b32.xlu0 %v165, 48
    %v690 = vpop.permute.xlu0 %689
    %v694 = vsel %vm264, %v685, 0
    %v697 = vsel %vm264, %v686, 0
    %699 = vmatprep.subr.mxu0 0.0
    %700 = vmatpush1.msra.mxu0 %v688
    %701 = vmatprep.subr.mxu0 0.0
    %702 = vmatpush1.msra.mxu0 %v690
    %703 = vmatprep.subr.mxu0 0.0
    %704 = vmatpush1.msra.mxu0 0.0
    %705 = vmatprep.subr.mxu0 0.0
    %706 = vmatpush1.msra.mxu0 0.0
    %707 = vmatprep.subr.mxu0 0.0
    %708 = vmatpush1.msra.mxu0 0.0
    %709 = vmatprep.subr.mxu0 0.0
    %710 = vmatpush1.msra.mxu0 0.0
    %711 = vmatprep.subr.mxu0 0.0
    %712 = vmatpush1.msra.mxu0 0.0
    %713 = vmatprep.subr.mxu0 0.0
    %714 = vmatpush1.msra.mxu0 0.0
    %715 = vmatprep.subr.mxu0 0.0
    %716 = vmatpush1.msra.mxu0 0.0
    %717 = vmatprep.subr.mxu0 0.0
    %718 = vmatpush1.msra.mxu0 0.0
    %719 = vmatprep.subr.mxu0 0.0
    %720 = vmatpush1.msra.mxu0 0.0
    %721 = vmatprep.subr.mxu0 0.0
    %722 = vmatpush1.msra.mxu0 0.0
    %723 = vmatprep.subr.mxu0 0.0
    %724 = vmatpush1.msra.mxu0 0.0
    %725 = vmatprep.subr.mxu0 0.0
    %726 = vmatpush1.msra.mxu0 0.0
    %727 = vmatprep.subr.mxu0 0.0
    %728 = vmatpush1.msra.mxu0 0.0
    %729 = vmatprep.subr.mxu0 0.0
    %730 = vmatpush1.msra.mxu0 0.0
    %731 = vmatprep.subr.mxu0 0.0
    %732 = vmatpush1.msra.mxu0 0.0
    %733 = vmatprep.subr.mxu0 0.0
    %734 = vmatpush1.msra.mxu0 0.0
    %735 = vmatprep.subr.mxu0 0.0
    %736 = vmatpush1.msra.mxu0 0.0
    %737 = vmatprep.subr.mxu0 0.0
    %738 = vmatpush1.msra.mxu0 0.0
    %739 = vmatprep.subr.mxu0 0.0
    %740 = vmatpush1.msra.mxu0 0.0
    %741 = vmatprep.subr.mxu0 0.0
    %742 = vmatpush1.msra.mxu0 0.0
    %743 = vmatprep.subr.mxu0 0.0
    %744 = vmatpush1.msra.mxu0 0.0
    %745 = vmatprep.subr.mxu0 0.0
    %746 = vmatpush1.msra.mxu0 0.0
    %747 = vmatprep.subr.mxu0 0.0
    %748 = vmatpush1.msra.mxu0 0.0
    %749 = vmatprep.subr.mxu0 0.0
    %750 = vmatpush1.msra.mxu0 0.0
    %751 = vmatprep.subr.mxu0 0.0
    %752 = vmatpush1.msra.mxu0 0.0
    %753 = vmatprep.subr.mxu0 0.0
    %754 = vmatpush1.msra.mxu0 0.0
    %755 = vmatprep.subr.mxu0 0.0
    %756 = vmatpush1.msra.mxu0 0.0
    %757 = vmatprep.subr.mxu0 0.0
    %758 = vmatpush1.msra.mxu0 0.0
    %759 = vmatprep.subr.mxu0 0.0
    %760 = vmatpush1.msra.mxu0 0.0
    %761 = vmatprep.subr.mxu0 0.0
    %762 = vmatpush1.msra.mxu0 0.0
    %763 = vmatprep.mubr.f32.mxu0 0.0
    %764 = vmatmul.mubr.f32.gmra.mrb[0].mxu0 %v694
    %v765 = vpop.f32.mrb[0].mxu0
    %v766 = vadd.f32 0.0, %v765
    %v767 = vpop.f32.mrb[0].mxu0
    %768 = vmatprep.mubr.f32.mxu0 0.0
    %769 = vmatmul.mubr.f32.gmra.mrb[0].mxu0 %v697
    %v770 = vpop.f32.mrb[0].mxu0
    %v771 = vadd.f32 0.0, %v770
    %v772 = vpop.f32.mrb[0].mxu0
    %773 = vdwg.mxu0
    %774 = vrot.lane.b32.xlu0 %v168, 104
    %v775 = vpop.permute.xlu0 %774
    %776 = vrot.lane.b32.xlu0 %v169, 104
    %v777 = vpop.permute.xlu0 %776
    %778 = vrot.lane.b32.xlu0 %v160, 72
    %v779 = vpop.permute.xlu0 %778
    %780 = vrot.lane.b32.xlu0 %v165, 72
    %v781 = vpop.permute.xlu0 %780
    %v782 = vsel %vm178, %v775, 0
    %v784 = vsel %vm178, %v777, 0
    %v786 = vsel %vm178, %v779, 0
    %v788 = vsel %vm178, %v781, 0
    %790 = vmatprep.subr.mxu0 0.0
    %791 = vmatpush1.xpose.msra.mxu0 %v786
    %792 = vmatprep.subr.mxu0 0.0
    %793 = vmatpush1.xpose.msra.mxu0 %v788
    %794 = vmatprep.subr.mxu0 0.0
    %795 = vmatpush1.xpose.msra.mxu0 0.0
    %796 = vmatprep.subr.mxu0 0.0
    %797 = vmatpush1.xpose.msra.mxu0 0.0
    %798 = vmatprep.subr.mxu0 0.0
    %799 = vmatpush1.xpose.msra.mxu0 0.0
    %800 = vmatprep.subr.mxu0 0.0
    %801 = vmatpush1.xpose.msra.mxu0 0.0
    %802 = vmatprep.subr.mxu0 0.0
    %803 = vmatpush1.xpose.msra.mxu0 0.0
    %804 = vmatprep.subr.mxu0 0.0
    %805 = vmatpush1.xpose.msra.mxu0 0.0
    %806 = vmatprep.subr.mxu0 0.0
    %807 = vmatpush1.xpose.msra.mxu0 0.0
    %808 = vmatprep.subr.mxu0 0.0
    %809 = vmatpush1.xpose.msra.mxu0 0.0
    %810 = vmatprep.subr.mxu0 0.0
    %811 = vmatpush1.xpose.msra.mxu0 0.0
    %812 = vmatprep.subr.mxu0 0.0
    %813 = vmatpush1.xpose.msra.mxu0 0.0
    %814 = vmatprep.subr.mxu0 0.0
    %815 = vmatpush1.xpose.msra.mxu0 0.0
    %816 = vmatprep.subr.mxu0 0.0
    %817 = vmatpush1.xpose.msra.mxu0 0.0
    %818 = vmatprep.subr.mxu0 0.0
    %819 = vmatpush1.xpose.msra.mxu0 0.0
    %820 = vmatprep.subr.mxu0 0.0
    %821 = vmatpush1.xpose.msra.mxu0 0.0
    %822 = vmatprep.subr.mxu0 0.0
    %823 = vmatpush1.xpose.msra.mxu0 0.0
    %824 = vmatprep.subr.mxu0 0.0
    %825 = vmatpush1.xpose.msra.mxu0 0.0
    %826 = vmatprep.subr.mxu0 0.0
    %827 = vmatpush1.xpose.msra.mxu0 0.0
    %828 = vmatprep.subr.mxu0 0.0
    %829 = vmatpush1.xpose.msra.mxu0 0.0
    %830 = vmatprep.subr.mxu0 0.0
    %831 = vmatpush1.xpose.msra.mxu0 0.0
    %832 = vmatprep.subr.mxu0 0.0
    %833 = vmatpush1.xpose.msra.mxu0 0.0
    %834 = vmatprep.subr.mxu0 0.0
    %835 = vmatpush1.xpose.msra.mxu0 0.0
    %836 = vmatprep.subr.mxu0 0.0
    %837 = vmatpush1.xpose.msra.mxu0 0.0
    %838 = vmatprep.subr.mxu0 0.0
    %839 = vmatpush1.xpose.msra.mxu0 0.0
    %840 = vmatprep.subr.mxu0 0.0
    %841 = vmatpush1.xpose.msra.mxu0 0.0
    %842 = vmatprep.subr.mxu0 0.0
    %843 = vmatpush1.xpose.msra.mxu0 0.0
    %844 = vmatprep.subr.mxu0 0.0
    %845 = vmatpush1.xpose.msra.mxu0 0.0
    %846 = vmatprep.subr.mxu0 0.0
    %847 = vmatpush1.xpose.msra.mxu0 0.0
    %848 = vmatprep.subr.mxu0 0.0
    %849 = vmatpush1.xpose.msra.mxu0 0.0
    %850 = vmatprep.subr.mxu0 0.0
    %851 = vmatpush1.xpose.msra.mxu0 0.0
    %852 = vmatprep.subr.mxu0 0.0
    %853 = vmatpush1.xpose.msra.mxu0 0.0
    %854 = vmatprep.mubr.f32.mxu0 0.0
    %855 = vmatmul.mubr.f32.gmra.mrb[0].mxu0 %v782
    %v856 = vpop.f32.mrb[0].mxu0
    %v857 = vadd.f32 %v170, %v856
    %v858 = vpop.f32.mrb[0].mxu0
    %859 = vmatprep.mubr.f32.mxu0 0.0
    %860 = vmatmul.mubr.f32.gmra.mrb[0].mxu0 %v784
    %v861 = vpop.f32.mrb[0].mxu0
    %v862 = vadd.f32 %v171, %v861
    %v863 = vpop.f32.mrb[0].mxu0
    %864 = vdwg.mxu0
    %v865 = vsel %vm264, %v857, -inf
    %866 = vmax.xlane.f32.xlu0 %v865
    %v867 = vpop.xlane.xlu0 %866
    %v868 = vsel %vm264, %v862, -inf
    %869 = vmax.xlane.f32.xlu0 %v868
    %v870 = vpop.xlane.xlu0 %869
    %v871 = vsub.f32 %v857, %v867
    %v872 = vsub.f32 %v862, %v870
    %v873 = vmul.f32 %v871, 1.442695
    %v874 = vpow.pop %v873
    %v875 = vmul.f32 %v872, 1.442695
    %v876 = vpow.pop %v875
    %v877 = vsel %vm264, %v874, 0.0
    %878 = vadd.xlane.f32.xlu0 %v877
    %v879 = vpop.xlane.xlu0 %878
    %v880 = vsel %vm264, %v876, 0.0
    %881 = vadd.xlane.f32.xlu0 %v880
    %v882 = vpop.xlane.xlu0 %881
    %v883 = vrcp.pop %v879
    %v884 = vrcp.pop %v882
    %v885 = vmul.f32 %v874, %v883
    %v886 = vmul.f32 %v876, %v884
    %887 = vrot.lane.b32.xlu0 %v160, 40
    %v888 = vpop.permute.xlu0 %887
    %889 = vrot.lane.b32.xlu0 %v165, 40
    %v890 = vpop.permute.xlu0 %889
    %v894 = vsel %vm264, %v885, 0
    %v897 = vsel %vm264, %v886, 0
    %899 = vmatprep.subr.mxu0 0.0
    %900 = vmatpush1.msra.mxu0 %v888
    %901 = vmatprep.subr.mxu0 0.0
    %902 = vmatpush1.msra.mxu0 %v890
    %903 = vmatprep.subr.mxu0 0.0
    %904 = vmatpush1.msra.mxu0 0.0
    %905 = vmatprep.subr.mxu0 0.0
    %906 = vmatpush1.msra.mxu0 0.0
    %907 = vmatprep.subr.mxu0 0.0
    %908 = vmatpush1.msra.mxu0 0.0
    %909 = vmatprep.subr.mxu0 0.0
    %910 = vmatpush1.msra.mxu0 0.0
    %911 = vmatprep.subr.mxu0 0.0
    %912 = vmatpush1.msra.mxu0 0.0
    %913 = vmatprep.subr.mxu0 0.0
    %914 = vmatpush1.msra.mxu0 0.0
    %915 = vmatprep.subr.mxu0 0.0
    %916 = vmatpush1.msra.mxu0 0.0
    %917 = vmatprep.subr.mxu0 0.0
    %918 = vmatpush1.msra.mxu0 0.0
    %919 = vmatprep.subr.mxu0 0.0
    %920 = vmatpush1.msra.mxu0 0.0
    %921 = vmatprep.subr.mxu0 0.0
    %922 = vmatpush1.msra.mxu0 0.0
    %923 = vmatprep.subr.mxu0 0.0
    %924 = vmatpush1.msra.mxu0 0.0
    %925 = vmatprep.subr.mxu0 0.0
    %926 = vmatpush1.msra.mxu0 0.0
    %927 = vmatprep.subr.mxu0 0.0
    %928 = vmatpush1.msra.mxu0 0.0
    %929 = vmatprep.subr.mxu0 0.0
    %930 = vmatpush1.msra.mxu0 0.0
    %931 = vmatprep.subr.mxu0 0.0
    %932 = vmatpush1.msra.mxu0 0.0
    %933 = vmatprep.subr.mxu0 0.0
    %934 = vmatpush1.msra.mxu0 0.0
    %935 = vmatprep.subr.mxu0 0.0
    %936 = vmatpush1.msra.mxu0 0.0
    %937 = vmatprep.subr.mxu0 0.0
    %938 = vmatpush1.msra.mxu0 0.0
    %939 = vmatprep.subr.mxu0 0.0
    %940 = vmatpush1.msra.mxu0 0.0
    %941 = vmatprep.subr.mxu0 0.0
    %942 = vmatpush1.msra.mxu0 0.0
    %943 = vmatprep.subr.mxu0 0.0
    %944 = vmatpush1.msra.mxu0 0.0
    %945 = vmatprep.subr.mxu0 0.0
    %946 = vmatpush1.msra.mxu0 0.0
    %947 = vmatprep.subr.mxu0 0.0
    %948 = vmatpush1.msra.mxu0 0.0
    %949 = vmatprep.subr.mxu0 0.0
    %950 = vmatpush1.msra.mxu0 0.0
    %951 = vmatprep.subr.mxu0 0.0
    %952 = vmatpush1.msra.mxu0 0.0
    %953 = vmatprep.subr.mxu0 0.0
    %954 = vmatpush1.msra.mxu0 0.0
    %955 = vmatprep.subr.mxu0 0.0
    %956 = vmatpush1.msra.mxu0 0.0
    %957 = vmatprep.subr.mxu0 0.0
    %958 = vmatpush1.msra.mxu0 0.0
    %959 = vmatprep.subr.mxu0 0.0
    %960 = vmatpush1.msra.mxu0 0.0
    %961 = vmatprep.subr.mxu0 0.0
    %962 = vmatpush1.msra.mxu0 0.0
    %963 = vmatprep.mubr.f32.mxu0 0.0
    %964 = vmatmul.mubr.f32.gmra.mrb[0].mxu0 %v894
    %v965 = vpop.f32.mrb[0].mxu0
    %v966 = vadd.f32 0.0, %v965
    %v967 = vpop.f32.mrb[0].mxu0
    %968 = vmatprep.mubr.f32.mxu0 0.0
    %969 = vmatmul.mubr.f32.gmra.mrb[0].mxu0 %v897
    %v970 = vpop.f32.mrb[0].mxu0
    %v971 = vadd.f32 0.0, %v970
    %v972 = vpop.f32.mrb[0].mxu0
    %973 = vdwg.mxu0
    %976 = vrot.lane.b32.xlu0 %v566, 8
    %v977 = vpop.permute.xlu0 %976
    %978 = vrot.lane.b32.xlu0 %v571, 8
    %v979 = vpop.permute.xlu0 %978
    %984 = vrot.lane.b32.xlu0 %v766, 16
    %v985 = vpop.permute.xlu0 %984
    %986 = vrot.lane.b32.xlu0 %v771, 16
    %v987 = vpop.permute.xlu0 %986
    %992 = vrot.lane.b32.xlu0 %v966, 24
    %v993 = vpop.permute.xlu0 %992
    %994 = vrot.lane.b32.xlu0 %v971, 24
    %v995 = vpop.permute.xlu0 %994
    %v998 = vsel %vm178, %v366, %v977
    %v999 = vsel %vm178, %v371, %v979
    %v1000 = vsel %vm264, %v998, %v985
    %v1001 = vsel %vm264, %v999, %v987
    %vm1002 = vcmask 195584
    %v1003 = vsel %vm1002, %v1000, %v993
    %v1004 = vsel %vm1002, %v1001, %v995
    %v1005 = vld [vmem:[#allocation7] sm:$0xff]
    %v1006 = vld [vmem:[#allocation7 + $0x8] sm:$0xff]
    %v1007 = vld [vmem:[#allocation7 + $0x10] sm:$0xff]
    %v1008 = vld [vmem:[#allocation7 + $0x18] sm:$0xff]
    %v1009 = vld [vmem:[%s4] sm:$0x1]
    %v1011 = vlaneseq
    %v1012 = vshrl.u32 %v1011, 7
    %v1013 = vsub.s32 0, %v1012
    %v1014 = vrot.slane %v1009, %v1013
    %vm1016 = vcmask 261120
    %v1018 = vsel %vm1016, %v1003, 0
    %v1021 = vsel %vm1016, %v1004, 0
    %1023 = vmatprep.subr.mxu0 0.0
    %1024 = vmatpush1.msra.mxu0 %v1005
    %1025 = vmatprep.subr.mxu0 0.0
    %1026 = vmatpush1.msra.mxu0 %v1006
    %1027 = vmatprep.subr.mxu0 0.0
    %1028 = vmatpush1.msra.mxu0 %v1007
    %1029 = vmatprep.subr.mxu0 0.0
    %1030 = vmatpush1.msra.mxu0 %v1008
    %1031 = vmatprep.subr.mxu0 0.0
    %1032 = vmatpush1.msra.mxu0 0.0
    %1033 = vmatprep.subr.mxu0 0.0
    %1034 = vmatpush1.msra.mxu0 0.0
    %1035 = vmatprep.subr.mxu0 0.0
    %1036 = vmatpush1.msra.mxu0 0.0
    %1037 = vmatprep.subr.mxu0 0.0
    %1038 = vmatpush1.msra.mxu0 0.0
    %1039 = vmatprep.subr.mxu0 0.0
    %1040 = vmatpush1.msra.mxu0 0.0
    %1041 = vmatprep.subr.mxu0 0.0
    %1042 = vmatpush1.msra.mxu0 0.0
    %1043 = vmatprep.subr.mxu0 0.0
    %1044 = vmatpush1.msra.mxu0 0.0
    %1045 = vmatprep.subr.mxu0 0.0
    %1046 = vmatpush1.msra.mxu0 0.0
    %1047 = vmatprep.subr.mxu0 0.0
    %1048 = vmatpush1.msra.mxu0 0.0
    %1049 = vmatprep.subr.mxu0 0.0
    %1050 = vmatpush1.msra.mxu0 0.0
    %1051 = vmatprep.subr.mxu0 0.0
    %1052 = vmatpush1.msra.mxu0 0.0
    %1053 = vmatprep.subr.mxu0 0.0
    %1054 = vmatpush1.msra.mxu0 0.0
    %1055 = vmatprep.subr.mxu0 0.0
    %1056 = vmatpush1.msra.mxu0 0.0
    %1057 = vmatprep.subr.mxu0 0.0
    %1058 = vmatpush1.msra.mxu0 0.0
    %1059 = vmatprep.subr.mxu0 0.0
    %1060 = vmatpush1.msra.mxu0 0.0
    %1061 = vmatprep.subr.mxu0 0.0
    %1062 = vmatpush1.msra.mxu0 0.0
    %1063 = vmatprep.subr.mxu0 0.0
    %1064 = vmatpush1.msra.mxu0 0.0
    %1065 = vmatprep.subr.mxu0 0.0
    %1066 = vmatpush1.msra.mxu0 0.0
    %1067 = vmatprep.subr.mxu0 0.0
    %1068 = vmatpush1.msra.mxu0 0.0
    %1069 = vmatprep.subr.mxu0 0.0
    %1070 = vmatpush1.msra.mxu0 0.0
    %1071 = vmatprep.subr.mxu0 0.0
    %1072 = vmatpush1.msra.mxu0 0.0
    %1073 = vmatprep.subr.mxu0 0.0
    %1074 = vmatpush1.msra.mxu0 0.0
    %1075 = vmatprep.subr.mxu0 0.0
    %1076 = vmatpush1.msra.mxu0 0.0
    %1077 = vmatprep.subr.mxu0 0.0
    %1078 = vmatpush1.msra.mxu0 0.0
    %1079 = vmatprep.subr.mxu0 0.0
    %1080 = vmatpush1.msra.mxu0 0.0
    %1081 = vmatprep.subr.mxu0 0.0
    %1082 = vmatpush1.msra.mxu0 0.0
    %1083 = vmatprep.subr.mxu0 0.0
    %1084 = vmatpush1.msra.mxu0 0.0
    %1085 = vmatprep.subr.mxu0 0.0
    %1086 = vmatpush1.msra.mxu0 0.0
    %1087 = vmatprep.mubr.f32.mxu0 0.0
    %1088 = vmatmul.mubr.f32.gmra.mrb[0].mxu0 %v1018
    %v1089 = vpop.f32.mrb[0].mxu0
    %v1090 = vadd.f32 %v1014, %v1089
    %v1091 = vpop.f32.mrb[0].mxu0
    %1092 = vmatprep.mubr.f32.mxu0 0.0
    %1093 = vmatmul.mubr.f32.gmra.mrb[0].mxu0 %v1021
    %v1094 = vpop.f32.mrb[0].mxu0
    %v1095 = vadd.f32 %v1014, %v1094
    %v1096 = vpop.f32.mrb[0].mxu0
    %1097 = vdwg.mxu0
    %1098 = vrot.lane.b32.xlu0 %v285, 32
    %v1099 = vpop.permute.xlu0 %1098
    %1100 = vrot.lane.b32.xlu0 %v286, 32
    %v1101 = vpop.permute.xlu0 %1100
    %1104 = vrot.lane.b32.xlu0 %v485, 48
    %v1105 = vpop.permute.xlu0 %1104
    %1106 = vrot.lane.b32.xlu0 %v486, 48
    %v1107 = vpop.permute.xlu0 %1106
    %1110 = vrot.lane.b32.xlu0 %v685, 64
    %v1111 = vpop.permute.xlu0 %1110
    %1112 = vrot.lane.b32.xlu0 %v686, 64
    %v1113 = vpop.permute.xlu0 %1112
    %1116 = vrot.lane.b32.xlu0 %v885, 80
    %v1117 = vpop.permute.xlu0 %1116
    %1118 = vrot.lane.b32.xlu0 %v886, 80
    %v1119 = vpop.permute.xlu0 %1118
    %v1122 = vsel %vm1016, %v1090, %v1099
    %v1123 = vsel %vm1016, %v1095, %v1101
    %vm1124 = vcmask 392192
    %v1125 = vsel %vm1124, %v1122, %v1105
    %v1126 = vsel %vm1124, %v1123, %v1107
    %vm1127 = vcmask 523264
    %v1128 = vsel %vm1127, %v1125, %v1111
    %v1129 = vsel %vm1127, %v1126, %v1113
    %vm1130 = vcmask 654336
    %v1131 = vsel %vm1130, %v1128, %v1117
    %v1132 = vsel %vm1130, %v1129, %v1119
    %1133 = vst.msk [vmem:[#allocation8] sm:$0xff] %vm86, %v1131
    %1134 = vst.msk [vmem:[#allocation8 + $0x8] sm:$0xff] %vm86, %v1132
    // Predicated region
    $region38: #{tpu_custom_call.1} parent=1 // pred_check
      _
    $region39: #{tpu_custom_call.1} parent=1 // pred_check_branch
      %1136 = sbr.rel (0) target = $region41
    $region40: #{tpu_custom_call.1} parent=1 // pred_region
      %s1138 = ssub.s32 256, 256
      %1139 = vsyncadd [#allocation4], %s1138
      %s1140 = sshll.u32 [#allocation8], 4
      %s1141 = int_to_ptr.vmem [resolvable:$true] %s1140
      %1146 = dma.vmem_to_hbm [thread:$0]  %s1141, 256, %s6, [#allocation4], 128, 128, 8
    $region41: #{tpu_custom_call.1} parent=1 // pred_fallthru
      _
    // Predicated region
    $region42: #{tpu_custom_call.1} parent=1 // pred_check
      _
    $region43: #{tpu_custom_call.1} parent=1 // pred_check_branch
      %1148 = sbr.rel (0) target = $region45
    $region44: #{tpu_custom_call.1} parent=1 // pred_region
      %1149 = dma.done [#allocation4], 256
    $region45: #{tpu_custom_call.1} parent=1 // pred_fallthru
      _
    %1150 = vsyncpa [#allocation3], 1
    %1151 = vsyncpa [#allocation6], 1
    %1152 = vsyncpa [#allocation4], 1

</llo_original>
